<compile_context>
chip_gen: v7x
topology: tpu7x:2x2x1
jax: 0.10.0
libtpu: 0.0.40
codegen_flags: <defaults>
</compile_context>

<pallas_src>
import jax
import jax.numpy as jnp
import numpy as np
from jax.experimental import pallas as pl
from jax.experimental.pallas import tpu as pltpu

EPS = 1e-5


def tcn_revin_kernel(x_ref, gamma_ref, beta_ref, beta_pf_ref, inv_g_pf_ref,
                     w1_ref, b1_ref, w2_ref, b2_ref, w3_ref, b3_ref,
                     wp_ref, bp_ref, out_ref):
    x = x_ref[...]                                   # (B, L, D) f32
    B, L, D = x.shape
    PD = out_ref.shape[1]                            # pred_len * D
    P = PD // D

    # ---- RevIN "norm": stats over the seq axis, biased variance ----------
    mean = jnp.mean(x, axis=1, keepdims=True)                       # (B,1,D)
    var = jnp.mean((x - mean) ** 2, axis=1, keepdims=True)          # (B,1,D)
    stdev = jnp.sqrt(var + EPS)                                     # (B,1,D)
    inv_std = 1.0 / stdev                                           # hoisted

    xn = (x - mean) * inv_std * gamma_ref[...] + beta_ref[...]      # (B,L,D)

    # ---- flatten (B,L,D) -> (B, L*D) in PyTorch reshape order -------------
    # (lane concat of the L normalized time-slices; keeps everything in vregs)
    xn_f = jnp.concatenate([xn[:, l, :] for l in range(L)], axis=1)  # (B, L*D)

    # ---- MLP encoder: one K=32 matmul, then 512->256->128 ----------------
    cdt = w1_ref.dtype   # f32, or bf16 for halved weight DMA (f32 accumulate)
    h = jnp.maximum(
        jnp.dot(xn_f.astype(cdt), w1_ref[...],
                preferred_element_type=jnp.float32) + b1_ref[...], 0.0)
    h = jnp.maximum(
        jnp.dot(h.astype(cdt), w2_ref[...],
                preferred_element_type=jnp.float32) + b2_ref[...], 0.0)
    h = jnp.maximum(
        jnp.dot(h.astype(cdt), w3_ref[...],
                preferred_element_type=jnp.float32) + b3_ref[...], 0.0)

    # ---- projection: single (128, P*D) matmul ------------------------------
    pf = jnp.dot(h.astype(cdt), wp_ref[...],
                 preferred_element_type=jnp.float32) + bp_ref[...]   # (B, P*D)

    # ---- RevIN "denorm" on the flat (B, P*D) slab, one dense store ---------
    m0 = mean[:, 0, :]                                               # (B, D)
    s0 = stdev[:, 0, :]                                              # (B, D)
    s_f = jnp.concatenate([s0] * P, axis=1)                          # (B, P*D)
    m_f = jnp.concatenate([m0] * P, axis=1)                          # (B, P*D)
    out = (pf - beta_pf_ref[...]) * inv_g_pf_ref[...] * s_f + m_f
    out_ref[...] = out.astype(out_ref.dtype)


def model_ensemble_forward(x, params, pred_len, weight_dtype=jnp.float32):
    """Equivalent of Model_Ensemble.forward(x) (ensemble weights w1/w2 unused)."""
    B, L, D = x.shape
    PD = pred_len * D

    gamma = params["revin_w"].reshape(1, 1, D)
    beta = params["revin_b"].reshape(1, 1, D)
    # Denorm constants, pre-tiled to the flat (P*D) layout in the wrapper.
    beta_pf = jnp.tile(params["revin_b"], pred_len).reshape(1, PD)
    inv_g_pf = jnp.tile(1.0 / (params["revin_w"] + EPS * EPS),
                        pred_len).reshape(1, PD)

    # PyTorch Linear stores weight as (out, in); kernel consumes x @ W^T.
    w1 = params["w1"].T.astype(weight_dtype)           # (L*D, 512)
    b1 = params["b1"].reshape(1, 512)
    w2 = params["w2"].T.astype(weight_dtype)           # (512, 256)
    b2 = params["b2"].reshape(1, 256)
    w3 = params["w3"].T.astype(weight_dtype)           # (256, 128)
    b3 = params["b3"].reshape(1, 128)
    wp = params["wp"].T.astype(weight_dtype)           # (128, P*D)
    bp = params["bp"].reshape(1, PD)

    operands = (x, gamma, beta, beta_pf, inv_g_pf,
                w1, b1, w2, b2, w3, b3, wp, bp)

    flops = 2 * B * (L * D * 512 + 512 * 256 + 256 * 128 + 128 * PD)
    bytes_accessed = int(sum(int(np.prod(a.shape)) * a.dtype.itemsize
                             for a in operands) + B * PD * 4)

    vmem = pl.BlockSpec(memory_space=pltpu.MemorySpace.VMEM)
    out_flat = pl.pallas_call(
        tcn_revin_kernel,
        out_shape=jax.ShapeDtypeStruct((B, PD), jnp.float32),
        in_specs=[vmem] * len(operands),
        out_specs=vmem,
        cost_estimate=pl.CostEstimate(flops=flops, transcendentals=B * D,
                                      bytes_accessed=bytes_accessed),
    )(*operands)
    # Lane-dense (B, P*D) output from the kernel; reshape here is free.
    return out_flat.reshape(B, pred_len, D)


def reference_forward(x, params, pred_len):
    """Pure-JAX reference mirroring the PyTorch module."""
    B, L, D = x.shape
    mean = jnp.mean(x, axis=1, keepdims=True)
    stdev = jnp.sqrt(jnp.var(x, axis=1, keepdims=True) + EPS)
    xn = (x - mean) / stdev * params["revin_w"] + params["revin_b"]
    xf = xn.reshape(B, -1)
    h = jax.nn.relu(xf @ params["w1"].T + params["b1"])
    h = jax.nn.relu(h @ params["w2"].T + params["b2"])
    h = jax.nn.relu(h @ params["w3"].T + params["b3"])
    pf = h @ params["wp"].T + params["bp"]
    pred = pf.reshape(B, pred_len, D)
    pred = (pred - params["revin_b"]) / (params["revin_w"] + EPS * EPS)
    return pred * stdev + mean


def make_params(key, enc_in, seq_len, pred_len):
    ks = jax.random.split(key, 8)

    def lin(kw, kb, fan_in, fan_out):
        bound = 1.0 / np.sqrt(fan_in)
        w = jax.random.uniform(kw, (fan_out, fan_in), jnp.float32, -bound, bound)
        b = jax.random.uniform(kb, (fan_out,), jnp.float32, -bound, bound)
        return w, b

    w1, b1 = lin(ks[0], ks[1], enc_in * seq_len, 512)
    w2, b2 = lin(ks[2], ks[3], 512, 256)
    w3, b3 = lin(ks[4], ks[5], 256, 128)
    wp, bp = lin(ks[6], ks[7], 128, enc_in * pred_len)
    return {
        "revin_w": jnp.ones((enc_in,), jnp.float32),   # RevIN affine init
        "revin_b": jnp.zeros((enc_in,), jnp.float32),
        "w1": w1, "b1": b1, "w2": w2, "b2": b2,
        "w3": w3, "b3": b3, "wp": wp, "bp": bp,
    }


if __name__ == "__main__":
    B, L, D, P = 2, 8, 4, 4          # batch, seq_len, enc_in, pred_len
    key = jax.random.PRNGKey(0)
    kx, kp = jax.random.split(key)
    x = jax.random.normal(kx, (B, L, D), jnp.float32)
    params = make_params(kp, D, L, P)

    # f32 weights: must match the pure-JAX / PyTorch reference tightly.
    out = jax.block_until_ready(model_ensemble_forward(x, params, P))
    ref = reference_forward(x, params, P)
    np.testing.assert_allclose(np.asarray(out), np.asarray(ref),
                               rtol=1e-4, atol=1e-4)

    # bf16-weight variant (halves weight HBM traffic; MXU-native on v6e/v7x).
    out_bf16 = jax.block_until_ready(
        model_ensemble_forward(x, params, P, weight_dtype=jnp.bfloat16))
    np.testing.assert_allclose(np.asarray(out_bf16), np.asarray(ref),
                               rtol=5e-2, atol=5e-2)

    print("KERNEL_OK")
</pallas_src>

<mosaic_0001>
module attributes {stable_mosaic.version = 11 : i64} {
  func.func @tcn_revin_kernel(%arg0: memref<2x8x4xf32, #tpu.memory_space<vmem>>, %arg1: memref<1x1x4xf32, #tpu.memory_space<vmem>>, %arg2: memref<1x1x4xf32, #tpu.memory_space<vmem>>, %arg3: memref<1x16xf32, #tpu.memory_space<vmem>>, %arg4: memref<1x16xf32, #tpu.memory_space<vmem>>, %arg5: memref<32x512xf32, #tpu.memory_space<vmem>>, %arg6: memref<1x512xf32, #tpu.memory_space<vmem>>, %arg7: memref<512x256xf32, #tpu.memory_space<vmem>>, %arg8: memref<1x256xf32, #tpu.memory_space<vmem>>, %arg9: memref<256x128xf32, #tpu.memory_space<vmem>>, %arg10: memref<1x128xf32, #tpu.memory_space<vmem>>, %arg11: memref<128x16xf32, #tpu.memory_space<vmem>>, %arg12: memref<1x16xf32, #tpu.memory_space<vmem>>, %arg13: memref<2x16xf32, #tpu.memory_space<vmem>>) attributes {dimension_semantics = [], scalar_prefetch = 0 : i64, scratch_operands = 0 : i64, tpu.core_type = #tpu.core_type<tc>} {
    %c0 = arith.constant 0 : index
    %c0_0 = arith.constant 0 : index
    %c0_1 = arith.constant 0 : index
    %0 = vector.load %arg0[%c0, %c0_0, %c0_1] : memref<2x8x4xf32, #tpu.memory_space<vmem>>, vector<2x8x4xf32>
    %cst = arith.constant dense<0.000000e+00> : vector<2x4xf32>
    %1 = vector.multi_reduction <add>, %0, %cst [1] : vector<2x8x4xf32> to vector<2x4xf32>
    %2 = vector.shape_cast %1 : vector<2x4xf32> to vector<2x1x4xf32>
    %cst_2 = arith.constant 8.000000e+00 : f32
    %3 = vector.broadcast %cst_2 : f32 to vector<2x1x4xf32>
    %4 = arith.divf %2, %3 : vector<2x1x4xf32>
    %5 = vector.broadcast %4 : vector<2x1x4xf32> to vector<2x8x4xf32>
    %6 = arith.subf %0, %5 : vector<2x8x4xf32>
    %7 = arith.mulf %6, %6 : vector<2x8x4xf32>
    %cst_3 = arith.constant dense<0.000000e+00> : vector<2x4xf32>
    %8 = vector.multi_reduction <add>, %7, %cst_3 [1] : vector<2x8x4xf32> to vector<2x4xf32>
    %9 = vector.shape_cast %8 : vector<2x4xf32> to vector<2x1x4xf32>
    %cst_4 = arith.constant 8.000000e+00 : f32
    %10 = vector.broadcast %cst_4 : f32 to vector<2x1x4xf32>
    %11 = arith.divf %9, %10 : vector<2x1x4xf32>
    %cst_5 = arith.constant 9.99999974E-6 : f32
    %12 = vector.broadcast %cst_5 : f32 to vector<2x1x4xf32>
    %13 = arith.addf %11, %12 : vector<2x1x4xf32>
    %14 = math.sqrt %13 : vector<2x1x4xf32>
    %cst_6 = arith.constant 1.000000e+00 : f32
    %15 = vector.broadcast %cst_6 : f32 to vector<2x1x4xf32>
    %16 = arith.divf %15, %14 : vector<2x1x4xf32>
    %17 = vector.broadcast %4 : vector<2x1x4xf32> to vector<2x8x4xf32>
    %18 = arith.subf %0, %17 : vector<2x8x4xf32>
    %19 = vector.broadcast %16 : vector<2x1x4xf32> to vector<2x8x4xf32>
    %20 = arith.mulf %18, %19 : vector<2x8x4xf32>
    %c0_7 = arith.constant 0 : index
    %c0_8 = arith.constant 0 : index
    %c0_9 = arith.constant 0 : index
    %21 = vector.load %arg1[%c0_7, %c0_8, %c0_9] : memref<1x1x4xf32, #tpu.memory_space<vmem>>, vector<1x1x4xf32>
    %22 = vector.broadcast %21 : vector<1x1x4xf32> to vector<2x8x4xf32>
    %23 = arith.mulf %20, %22 : vector<2x8x4xf32>
    %c0_10 = arith.constant 0 : index
    %c0_11 = arith.constant 0 : index
    %c0_12 = arith.constant 0 : index
    %24 = vector.load %arg2[%c0_10, %c0_11, %c0_12] : memref<1x1x4xf32, #tpu.memory_space<vmem>>, vector<1x1x4xf32>
    %25 = vector.broadcast %24 : vector<1x1x4xf32> to vector<2x8x4xf32>
    %26 = arith.addf %23, %25 : vector<2x8x4xf32>
    %27 = vector.extract_strided_slice %26 {offsets = [0, 0, 0], sizes = [2, 1, 4], strides = [1, 1, 1]} : vector<2x8x4xf32> to vector<2x1x4xf32>
    %28 = vector.shape_cast %27 : vector<2x1x4xf32> to vector<2x4xf32>
    %29 = vector.extract_strided_slice %26 {offsets = [0, 1, 0], sizes = [2, 1, 4], strides = [1, 1, 1]} : vector<2x8x4xf32> to vector<2x1x4xf32>
    %30 = vector.shape_cast %29 : vector<2x1x4xf32> to vector<2x4xf32>
    %31 = vector.extract_strided_slice %26 {offsets = [0, 2, 0], sizes = [2, 1, 4], strides = [1, 1, 1]} : vector<2x8x4xf32> to vector<2x1x4xf32>
    %32 = vector.shape_cast %31 : vector<2x1x4xf32> to vector<2x4xf32>
    %33 = vector.extract_strided_slice %26 {offsets = [0, 3, 0], sizes = [2, 1, 4], strides = [1, 1, 1]} : vector<2x8x4xf32> to vector<2x1x4xf32>
    %34 = vector.shape_cast %33 : vector<2x1x4xf32> to vector<2x4xf32>
    %35 = vector.extract_strided_slice %26 {offsets = [0, 4, 0], sizes = [2, 1, 4], strides = [1, 1, 1]} : vector<2x8x4xf32> to vector<2x1x4xf32>
    %36 = vector.shape_cast %35 : vector<2x1x4xf32> to vector<2x4xf32>
    %37 = vector.extract_strided_slice %26 {offsets = [0, 5, 0], sizes = [2, 1, 4], strides = [1, 1, 1]} : vector<2x8x4xf32> to vector<2x1x4xf32>
    %38 = vector.shape_cast %37 : vector<2x1x4xf32> to vector<2x4xf32>
    %39 = vector.extract_strided_slice %26 {offsets = [0, 6, 0], sizes = [2, 1, 4], strides = [1, 1, 1]} : vector<2x8x4xf32> to vector<2x1x4xf32>
    %40 = vector.shape_cast %39 : vector<2x1x4xf32> to vector<2x4xf32>
    %41 = vector.extract_strided_slice %26 {offsets = [0, 7, 0], sizes = [2, 1, 4], strides = [1, 1, 1]} : vector<2x8x4xf32> to vector<2x1x4xf32>
    %42 = vector.shape_cast %41 : vector<2x1x4xf32> to vector<2x4xf32>
    %43 = tpu.concatenate %28, %30, %32, %34, %36, %38, %40, %42 in 1 : vector<2x4xf32>, vector<2x4xf32>, vector<2x4xf32>, vector<2x4xf32>, vector<2x4xf32>, vector<2x4xf32>, vector<2x4xf32>, vector<2x4xf32> -> vector<2x32xf32>
    %c0_13 = arith.constant 0 : index
    %c0_14 = arith.constant 0 : index
    %44 = vector.load %arg5[%c0_13, %c0_14] : memref<32x512xf32, #tpu.memory_space<vmem>>, vector<32x512xf32>
    %cst_15 = arith.constant dense<0.000000e+00> : vector<2x512xf32>
    %45 = tpu.matmul %43, %44, %cst_15 {dimension_numbers = #tpu.dot_dimension_numbers<[1], [0], [0], [1], [0, 0, 1, 1], [], []>} : vector<2x32xf32>, vector<32x512xf32>, vector<2x512xf32> -> vector<2x512xf32>
    %c0_16 = arith.constant 0 : index
    %c0_17 = arith.constant 0 : index
    %46 = vector.load %arg6[%c0_16, %c0_17] : memref<1x512xf32, #tpu.memory_space<vmem>>, vector<1x512xf32>
    %47 = vector.broadcast %46 : vector<1x512xf32> to vector<2x512xf32>
    %48 = arith.addf %45, %47 : vector<2x512xf32>
    %cst_18 = arith.constant 0.000000e+00 : f32
    %49 = vector.broadcast %cst_18 : f32 to vector<2x512xf32>
    %50 = arith.maximumf %48, %49 : vector<2x512xf32>
    %c0_19 = arith.constant 0 : index
    %c0_20 = arith.constant 0 : index
    %51 = vector.load %arg7[%c0_19, %c0_20] : memref<512x256xf32, #tpu.memory_space<vmem>>, vector<512x256xf32>
    %cst_21 = arith.constant dense<0.000000e+00> : vector<2x256xf32>
    %52 = tpu.matmul %50, %51, %cst_21 {dimension_numbers = #tpu.dot_dimension_numbers<[1], [0], [0], [1], [0, 0, 1, 1], [], []>} : vector<2x512xf32>, vector<512x256xf32>, vector<2x256xf32> -> vector<2x256xf32>
    %c0_22 = arith.constant 0 : index
    %c0_23 = arith.constant 0 : index
    %53 = vector.load %arg8[%c0_22, %c0_23] : memref<1x256xf32, #tpu.memory_space<vmem>>, vector<1x256xf32>
    %54 = vector.broadcast %53 : vector<1x256xf32> to vector<2x256xf32>
    %55 = arith.addf %52, %54 : vector<2x256xf32>
    %cst_24 = arith.constant 0.000000e+00 : f32
    %56 = vector.broadcast %cst_24 : f32 to vector<2x256xf32>
    %57 = arith.maximumf %55, %56 : vector<2x256xf32>
    %c0_25 = arith.constant 0 : index
    %c0_26 = arith.constant 0 : index
    %58 = vector.load %arg9[%c0_25, %c0_26] : memref<256x128xf32, #tpu.memory_space<vmem>>, vector<256x128xf32>
    %cst_27 = arith.constant dense<0.000000e+00> : vector<2x128xf32>
    %59 = tpu.matmul %57, %58, %cst_27 {dimension_numbers = #tpu.dot_dimension_numbers<[1], [0], [0], [1], [0, 0, 1, 1], [], []>} : vector<2x256xf32>, vector<256x128xf32>, vector<2x128xf32> -> vector<2x128xf32>
    %c0_28 = arith.constant 0 : index
    %c0_29 = arith.constant 0 : index
    %60 = vector.load %arg10[%c0_28, %c0_29] : memref<1x128xf32, #tpu.memory_space<vmem>>, vector<1x128xf32>
    %61 = vector.broadcast %60 : vector<1x128xf32> to vector<2x128xf32>
    %62 = arith.addf %59, %61 : vector<2x128xf32>
    %cst_30 = arith.constant 0.000000e+00 : f32
    %63 = vector.broadcast %cst_30 : f32 to vector<2x128xf32>
    %64 = arith.maximumf %62, %63 : vector<2x128xf32>
    %c0_31 = arith.constant 0 : index
    %c0_32 = arith.constant 0 : index
    %65 = vector.load %arg11[%c0_31, %c0_32] : memref<128x16xf32, #tpu.memory_space<vmem>>, vector<128x16xf32>
    %cst_33 = arith.constant dense<0.000000e+00> : vector<2x16xf32>
    %66 = tpu.matmul %64, %65, %cst_33 {dimension_numbers = #tpu.dot_dimension_numbers<[1], [0], [0], [1], [0, 0, 1, 1], [], []>} : vector<2x128xf32>, vector<128x16xf32>, vector<2x16xf32> -> vector<2x16xf32>
    %c0_34 = arith.constant 0 : index
    %c0_35 = arith.constant 0 : index
    %67 = vector.load %arg12[%c0_34, %c0_35] : memref<1x16xf32, #tpu.memory_space<vmem>>, vector<1x16xf32>
    %68 = vector.broadcast %67 : vector<1x16xf32> to vector<2x16xf32>
    %69 = arith.addf %66, %68 : vector<2x16xf32>
    %70 = vector.shape_cast %4 : vector<2x1x4xf32> to vector<2x4xf32>
    %71 = vector.shape_cast %14 : vector<2x1x4xf32> to vector<2x4xf32>
    %72 = tpu.concatenate %71, %71, %71, %71 in 1 : vector<2x4xf32>, vector<2x4xf32>, vector<2x4xf32>, vector<2x4xf32> -> vector<2x16xf32>
    %73 = tpu.concatenate %70, %70, %70, %70 in 1 : vector<2x4xf32>, vector<2x4xf32>, vector<2x4xf32>, vector<2x4xf32> -> vector<2x16xf32>
    %c0_36 = arith.constant 0 : index
    %c0_37 = arith.constant 0 : index
    %74 = vector.load %arg3[%c0_36, %c0_37] : memref<1x16xf32, #tpu.memory_space<vmem>>, vector<1x16xf32>
    %75 = vector.broadcast %74 : vector<1x16xf32> to vector<2x16xf32>
    %76 = arith.subf %69, %75 : vector<2x16xf32>
    %c0_38 = arith.constant 0 : index
    %c0_39 = arith.constant 0 : index
    %77 = vector.load %arg4[%c0_38, %c0_39] : memref<1x16xf32, #tpu.memory_space<vmem>>, vector<1x16xf32>
    %78 = vector.broadcast %77 : vector<1x16xf32> to vector<2x16xf32>
    %79 = arith.mulf %76, %78 : vector<2x16xf32>
    %80 = arith.mulf %79, %72 : vector<2x16xf32>
    %81 = arith.addf %80, %73 : vector<2x16xf32>
    %c0_40 = arith.constant 0 : index
    %c0_41 = arith.constant 0 : index
    %82 = vector.load %arg13[%c0_40, %c0_41] : memref<2x16xf32, #tpu.memory_space<vmem>>, vector<2x16xf32>
    tpu.vector_store %arg13[%c0_40, %c0_41], %81 {strides = array<i32>} : memref<2x16xf32, #tpu.memory_space<vmem>>, vector<2x16xf32>,
    return
  }
}

</mosaic_0001>

<llo_original>
// kernel: tpu_custom_call.1
$region0: #{tpu_custom_call.1}
  #allocation0 [shape = 'u32[]', space=smem, size = 0x4, offset = 0x4, fixed_abs, tag = 'smem constant byte address 0x4 - core index']
  #allocation1 [shape = 'u32[144,128]{1,0:T(1,128)}', space=vmem, size = 0x12000, scoped, tag = 'internal scratch']
  %s0 = inlined_call_operand.vmem [shape: f32[2,8,4], index: 0, kind: input, shape index: {}]
  %s1 = inlined_call_operand.vmem [shape: f32[1,1,4], index: 1, kind: input, shape index: {}]
  %s2 = inlined_call_operand.vmem [shape: f32[1,1,4], index: 2, kind: input, shape index: {}]
  %s3 = inlined_call_operand.vmem [shape: f32[1,16], index: 3, kind: input, shape index: {}]
  %s4 = inlined_call_operand.vmem [shape: f32[1,16], index: 4, kind: input, shape index: {}]
  %s5 = inlined_call_operand.vmem [shape: f32[32,512], index: 5, kind: input, shape index: {}]
  %s6 = inlined_call_operand.vmem [shape: f32[1,512], index: 6, kind: input, shape index: {}]
  %s7 = inlined_call_operand.hbm [shape: f32[512,256], index: 7, kind: input, shape index: {}]
  %s8 = inlined_call_operand.vmem [shape: f32[1,256], index: 8, kind: input, shape index: {}]
  %s9 = inlined_call_operand.hbm [shape: f32[256,128], index: 9, kind: input, shape index: {}]
  %s10 = inlined_call_operand.vmem [shape: f32[1,128], index: 10, kind: input, shape index: {}]
  %s11 = inlined_call_operand.vmem [shape: f32[128,16], index: 11, kind: input, shape index: {}]
  %s12 = inlined_call_operand.vmem [shape: f32[1,16], index: 12, kind: input, shape index: {}]
  %s13 = inlined_call_operand.hbm [shape: f32[2,16], index: 13, kind: output, shape index: {}]
  %s14 = sld [smem:[#allocation0]]
  $region70: #{tpu_custom_call.1} parent=0
    _
  %s16 = ssub.s32 1, %s14
  %s17 = scalar_select 0, %s16, %s14
  $region1: #{tpu_custom_call.1} parent=0
    #allocation2 [shape = 'u8[524288]{0}', space=vmem, size = 0x80000, scoped, tag = 'input window, operand 7, single buffered']
    #allocation3 [shape = 's32[1]{0}', space=sflag, size = 0x4, scoped, tag = 'scoped memory for tpu_custom_call.1']
    #allocation4 [shape = 's32[1]{0}', space=sflag, size = 0x4, scoped, tag = 'scoped memory for tpu_custom_call.1']
    #allocation5 [shape = 'u8[131072]{0}', space=vmem, size = 0x20000, scoped, tag = 'input window, operand 9, single buffered']
    #allocation6 [shape = 's32[1]{0}', space=sflag, size = 0x4, scoped, tag = 'scoped memory for tpu_custom_call.1']
    #allocation7 [shape = 'u8[1024]{0}', space=vmem, size = 0x400, scoped, tag = 'output window, operand 0, single buffered']
    %18 = vsyncpa [#allocation3], 0
    %19 = vsyncpa [#allocation6], 0
    %20 = vsyncpa [#allocation4], 0
    // Predicated region
    $region2: #{tpu_custom_call.1} parent=1 // pred_check
      _
    $region3: #{tpu_custom_call.1} parent=1 // pred_check_branch
      %22 = sbr.rel (0) target = $region5
    $region4: #{tpu_custom_call.1} parent=1 // pred_region
      _
    $region5: #{tpu_custom_call.1} parent=1 // pred_fallthru
      _
    // Predicated region
    $region6: #{tpu_custom_call.1} parent=1 // pred_check
      _
    $region7: #{tpu_custom_call.1} parent=1 // pred_check_branch
      %24 = sbr.rel (0) target = $region9
    $region8: #{tpu_custom_call.1} parent=1 // pred_region
      _
    $region9: #{tpu_custom_call.1} parent=1 // pred_fallthru
      _
    // Predicated region
    $region10: #{tpu_custom_call.1} parent=1 // pred_check
      _
    $region11: #{tpu_custom_call.1} parent=1 // pred_check_branch
      %26 = sbr.rel (0) target = $region13
    $region12: #{tpu_custom_call.1} parent=1 // pred_region
      _
    $region13: #{tpu_custom_call.1} parent=1 // pred_fallthru
      _
    // Predicated region
    $region14: #{tpu_custom_call.1} parent=1 // pred_check
      _
    $region15: #{tpu_custom_call.1} parent=1 // pred_check_branch
      %28 = sbr.rel (0) target = $region17
    $region16: #{tpu_custom_call.1} parent=1 // pred_region
      _
    $region17: #{tpu_custom_call.1} parent=1 // pred_fallthru
      _
    // Predicated region
    $region18: #{tpu_custom_call.1} parent=1 // pred_check
      _
    $region19: #{tpu_custom_call.1} parent=1 // pred_check_branch
      %30 = sbr.rel (0) target = $region21
    $region20: #{tpu_custom_call.1} parent=1 // pred_region
      _
    $region21: #{tpu_custom_call.1} parent=1 // pred_fallthru
      _
    // Predicated region
    $region22: #{tpu_custom_call.1} parent=1 // pred_check
      _
    $region23: #{tpu_custom_call.1} parent=1 // pred_check_branch
      %32 = sbr.rel (0) target = $region25
    $region24: #{tpu_custom_call.1} parent=1 // pred_region
      _
    $region25: #{tpu_custom_call.1} parent=1 // pred_fallthru
      _
    // Predicated region
    $region26: #{tpu_custom_call.1} parent=1 // pred_check
      _
    $region27: #{tpu_custom_call.1} parent=1 // pred_check_branch
      %34 = sbr.rel (0) target = $region29
    $region28: #{tpu_custom_call.1} parent=1 // pred_region
      _
    $region29: #{tpu_custom_call.1} parent=1 // pred_fallthru
      _
    // Predicated region
    $region30: #{tpu_custom_call.1} parent=1 // pred_check
      _
    $region31: #{tpu_custom_call.1} parent=1 // pred_check_branch
      %36 = sbr.rel (0) target = $region33
    $region32: #{tpu_custom_call.1} parent=1 // pred_region
      %s38 = ssub.s32 16384, 16384
      %39 = vsyncadd [#allocation3], %s38
      %s40 = sshll.u32 [#allocation2], 4
      %s41 = int_to_ptr.vmem [resolvable:$true] %s40
      %46 = dma.hbm_to_vmem [thread:$0]  %s7, 16384, %s41, [#allocation3], 256, 256, 16
    $region33: #{tpu_custom_call.1} parent=1 // pred_fallthru
      _
    // Predicated region
    $region34: #{tpu_custom_call.1} parent=1 // pred_check
      _
    $region35: #{tpu_custom_call.1} parent=1 // pred_check_branch
      %48 = sbr.rel (0) target = $region37
    $region36: #{tpu_custom_call.1} parent=1 // pred_region
      _
    $region37: #{tpu_custom_call.1} parent=1 // pred_fallthru
      _
    // Predicated region
    $region38: #{tpu_custom_call.1} parent=1 // pred_check
      _
    $region39: #{tpu_custom_call.1} parent=1 // pred_check_branch
      %50 = sbr.rel (0) target = $region41
    $region40: #{tpu_custom_call.1} parent=1 // pred_region
      %s52 = ssub.s32 4096, 4096
      %53 = vsyncadd [#allocation6], %s52
      %s54 = sshll.u32 [#allocation5], 4
      %s55 = int_to_ptr.vmem [resolvable:$true] %s54
      %60 = dma.hbm_to_vmem [thread:$0]  %s9, 4096, %s55, [#allocation6], 128, 128, 8
    $region41: #{tpu_custom_call.1} parent=1 // pred_fallthru
      _
    // Predicated region
    $region42: #{tpu_custom_call.1} parent=1 // pred_check
      _
    $region43: #{tpu_custom_call.1} parent=1 // pred_check_branch
      %62 = sbr.rel (0) target = $region45
    $region44: #{tpu_custom_call.1} parent=1 // pred_region
      _
    $region45: #{tpu_custom_call.1} parent=1 // pred_fallthru
      _
    // Predicated region
    $region46: #{tpu_custom_call.1} parent=1 // pred_check
      _
    $region47: #{tpu_custom_call.1} parent=1 // pred_check_branch
      %64 = sbr.rel (0) target = $region49
    $region48: #{tpu_custom_call.1} parent=1 // pred_region
      _
    $region49: #{tpu_custom_call.1} parent=1 // pred_fallthru
      _
    // Predicated region
    $region50: #{tpu_custom_call.1} parent=1 // pred_check
      _
    $region51: #{tpu_custom_call.1} parent=1 // pred_check_branch
      %66 = sbr.rel (0) target = $region53
    $region52: #{tpu_custom_call.1} parent=1 // pred_region
      _
    $region53: #{tpu_custom_call.1} parent=1 // pred_fallthru
      _
    // Predicated region
    $region54: #{tpu_custom_call.1} parent=1 // pred_check
      _
    $region55: #{tpu_custom_call.1} parent=1 // pred_check_branch
      %68 = sbr.rel (0) target = $region57
    $region56: #{tpu_custom_call.1} parent=1 // pred_region
      %69 = dma.done [#allocation3], 16384
    $region57: #{tpu_custom_call.1} parent=1 // pred_fallthru
      _
    // Predicated region
    $region58: #{tpu_custom_call.1} parent=1 // pred_check
      _
    $region59: #{tpu_custom_call.1} parent=1 // pred_check_branch
      %71 = sbr.rel (0) target = $region61
    $region60: #{tpu_custom_call.1} parent=1 // pred_region
      %72 = dma.done [#allocation6], 4096
    $region61: #{tpu_custom_call.1} parent=1 // pred_fallthru
      _
    %v73 = vld [vmem:[%s0] sm:$0xff]
    %v74 = vld [vmem:[%s0 + $0x8] sm:$0xff]
    %vm75 = vcmask 31744
    %v76 = vsel %vm75, %v73, 0.0
    %v77 = vrot.slane %v76, 4
    %v78 = vadd.f32 %v76, %v77
    %v79 = vrot.slane %v78, 2
    %v80 = vadd.f32 %v78, %v79
    %v81 = vrot.slane %v80, 1
    %v82 = vadd.f32 %v80, %v81
    %v83 = vsel %vm75, %v74, 0.0
    %v84 = vrot.slane %v83, 4
    %v85 = vadd.f32 %v83, %v84
    %v86 = vrot.slane %v85, 2
    %v87 = vadd.f32 %v85, %v86
    %v88 = vrot.slane %v87, 1
    %v89 = vadd.f32 %v87, %v88
    %v90 = vrcp.pop 8.0
    %v91 = vmul.f32 %v82, %v90
    %v92 = vmul.f32 %v89, %v90
    %v93 = vsub.f32 %v73, %v91
    %v94 = vsub.f32 %v74, %v92
    %v95 = vmul.f32 %v93, %v93
    %v96 = vmul.f32 %v94, %v94
    %v97 = vsel %vm75, %v95, 0.0
    %v98 = vrot.slane %v97, 4
    %v99 = vadd.f32 %v97, %v98
    %v100 = vrot.slane %v99, 2
    %v101 = vadd.f32 %v99, %v100
    %v102 = vrot.slane %v101, 1
    %v103 = vadd.f32 %v101, %v102
    %v104 = vsel %vm75, %v96, 0.0
    %v105 = vrot.slane %v104, 4
    %v106 = vadd.f32 %v104, %v105
    %v107 = vrot.slane %v106, 2
    %v108 = vadd.f32 %v106, %v107
    %v109 = vrot.slane %v108, 1
    %v110 = vadd.f32 %v108, %v109
    %v111 = vmul.f32 %v103, %v90
    %v112 = vmul.f32 %v110, %v90
    %v113 = vadd.f32 %v111, 1e-05
    %v114 = vadd.f32 %v112, 1e-05
    %v115 = vrsqrt.pop %v113
    %v116 = vmul.f32 %v113, %v115
    %vm117 = vcmp.eq.f32.partialorder %v113, inf
    %v118 = vsel %vm117, %v113, %v116
    %vm119 = vcmp.eq.f32.partialorder %v113, 0.0
    %v120 = vand.u32 %v113, 2147483648
    %v121 = vsel %vm119, %v120, %v118
    %v122 = vrsqrt.pop %v114
    %v123 = vmul.f32 %v114, %v122
    %vm124 = vcmp.eq.f32.partialorder %v114, inf
    %v125 = vsel %vm124, %v114, %v123
    %vm126 = vcmp.eq.f32.partialorder %v114, 0.0
    %v127 = vand.u32 %v114, 2147483648
    %v128 = vsel %vm126, %v127, %v125
    %v129 = vrcp.pop %v121
    %v130 = vmul.f32 1.0, %v129
    %v131 = vrcp.pop %v128
    %v132 = vmul.f32 1.0, %v131
    %v133 = vmul.f32 %v93, %v130
    %v134 = vmul.f32 %v94, %v132
    %v135 = vld [vmem:[%s1] sm:$0x1]
    %v137 = vlaneseq
    %v138 = vshrl.u32 %v137, 7
    %v139 = vsub.s32 0, %v138
    %v140 = vrot.slane %v135, %v139
    %v142 = vmul.f32 %v133, %v140
    %v143 = vmul.f32 %v134, %v140
    %v144 = vld [vmem:[%s2] sm:$0x1]
    %v146 = vlaneseq
    %v147 = vshrl.u32 %v146, 7
    %v148 = vsub.s32 0, %v147
    %v149 = vrot.slane %v144, %v148
    %v151 = vadd.f32 %v142, %v149
    %v152 = vadd.f32 %v143, %v149
    %v155 = vrot.slane %v152, 7
    %vm156 = vcmask 1041409
    %v157 = vsel %vm156, %v155, %v151
    %v159 = vrot.slane %v151, 1
    %v160 = vsel %vm156, %v152, %v159
    %161 = vrot.lane.b32.xlu0 %v160, 4
    %v162 = vpop.permute.xlu0 %161
    %v164 = vrot.slane %v151, 2
    %v165 = vrot.slane %v152, 1
    %v166 = vsel %vm156, %v165, %v164
    %167 = vrot.lane.b32.xlu0 %v166, 8
    %v168 = vpop.permute.xlu0 %167
    %v170 = vrot.slane %v151, 3
    %v171 = vrot.slane %v152, 2
    %v172 = vsel %vm156, %v171, %v170
    %173 = vrot.lane.b32.xlu0 %v172, 12
    %v174 = vpop.permute.xlu0 %173
    %v176 = vrot.slane %v151, 4
    %v177 = vrot.slane %v152, 3
    %v178 = vsel %vm156, %v177, %v176
    %179 = vrot.lane.b32.xlu0 %v178, 16
    %v180 = vpop.permute.xlu0 %179
    %v182 = vrot.slane %v151, 5
    %v183 = vrot.slane %v152, 4
    %v184 = vsel %vm156, %v183, %v182
    %185 = vrot.lane.b32.xlu0 %v184, 20
    %v186 = vpop.permute.xlu0 %185
    %v188 = vrot.slane %v151, 6
    %v189 = vrot.slane %v152, 5
    %v190 = vsel %vm156, %v189, %v188
    %191 = vrot.lane.b32.xlu0 %v190, 24
    %v192 = vpop.permute.xlu0 %191
    %v194 = vrot.slane %v151, 7
    %v195 = vrot.slane %v152, 6
    %v196 = vsel %vm156, %v195, %v194
    %197 = vrot.lane.b32.xlu0 %v196, 28
    %v198 = vpop.permute.xlu0 %197
    %v200 = vsel %vm75, %v157, %v162
    %vm201 = vcmask 64512
    %v202 = vsel %vm201, %v200, %v168
    %vm203 = vcmask 97280
    %v204 = vsel %vm203, %v202, %v174
    %vm205 = vcmask 130048
    %v206 = vsel %vm205, %v204, %v180
    %vm207 = vcmask 162816
    %v208 = vsel %vm207, %v206, %v186
    %vm209 = vcmask 195584
    %v210 = vsel %vm209, %v208, %v192
    %vm211 = vcmask 228352
    %v212 = vsel %vm211, %v210, %v198
    %v213 = vld [vmem:[%s5] sm:$0xff]
    %v214 = vld [vmem:[%s5 + $0x8] sm:$0xff]
    %v215 = vld [vmem:[%s5 + $0x10] sm:$0xff]
    %v216 = vld [vmem:[%s5 + $0x18] sm:$0xff]
    %v217 = vld [vmem:[%s5 + $0x20] sm:$0xff]
    %v218 = vld [vmem:[%s5 + $0x28] sm:$0xff]
    %v219 = vld [vmem:[%s5 + $0x30] sm:$0xff]
    %v220 = vld [vmem:[%s5 + $0x38] sm:$0xff]
    %v221 = vld [vmem:[%s5 + $0x40] sm:$0xff]
    %v222 = vld [vmem:[%s5 + $0x48] sm:$0xff]
    %v223 = vld [vmem:[%s5 + $0x50] sm:$0xff]
    %v224 = vld [vmem:[%s5 + $0x58] sm:$0xff]
    %v225 = vld [vmem:[%s5 + $0x60] sm:$0xff]
    %v226 = vld [vmem:[%s5 + $0x68] sm:$0xff]
    %v227 = vld [vmem:[%s5 + $0x70] sm:$0xff]
    %v228 = vld [vmem:[%s5 + $0x78] sm:$0xff]
    %v229 = vld [vmem:[%s6] sm:$0xf]
    %v231 = vlaneseq
    %v232 = vshrl.u32 %v231, 7
    %v233 = vsub.s32 0, %v232
    %v234 = vrot.slane %v229, %v233
    %v235 = vlaneseq
    %v236 = vshrl.u32 %v235, 7
    %v237 = vsub.s32 1, %v236
    %v238 = vrot.slane %v229, %v237
    %v239 = vlaneseq
    %v240 = vshrl.u32 %v239, 7
    %v241 = vsub.s32 2, %v240
    %v242 = vrot.slane %v229, %v241
    %v243 = vlaneseq
    %v244 = vshrl.u32 %v243, 7
    %v245 = vsub.s32 3, %v244
    %v246 = vrot.slane %v229, %v245
    %vm251 = vcmask 261120
    %v253 = vsel %vm251, %v212, 0
    %255 = vmatprep.subr.mxu0 %v214
    %256 = vmatpush1.msra.mxu0 %v213
    %257 = vmatprep.subr.mxu0 %v218
    %258 = vmatpush1.msra.mxu0 %v217
    %259 = vmatprep.subr.mxu0 %v222
    %260 = vmatpush1.msra.mxu0 %v221
    %261 = vmatprep.subr.mxu0 %v226
    %262 = vmatpush1.msra.mxu0 %v225
    %263 = vmatprep.subr.mxu0 0.0
    %264 = vmatpush1.msra.mxu0 0.0
    %265 = vmatprep.subr.mxu0 0.0
    %266 = vmatpush1.msra.mxu0 0.0
    %267 = vmatprep.subr.mxu0 0.0
    %268 = vmatpush1.msra.mxu0 0.0
    %269 = vmatprep.subr.mxu0 0.0
    %270 = vmatpush1.msra.mxu0 0.0
    %271 = vmatprep.subr.mxu0 0.0
    %272 = vmatpush1.msra.mxu0 0.0
    %273 = vmatprep.subr.mxu0 0.0
    %274 = vmatpush1.msra.mxu0 0.0
    %275 = vmatprep.subr.mxu0 0.0
    %276 = vmatpush1.msra.mxu0 0.0
    %277 = vmatprep.subr.mxu0 0.0
    %278 = vmatpush1.msra.mxu0 0.0
    %279 = vmatprep.subr.mxu0 0.0
    %280 = vmatpush1.msra.mxu0 0.0
    %281 = vmatprep.subr.mxu0 0.0
    %282 = vmatpush1.msra.mxu0 0.0
    %283 = vmatprep.subr.mxu0 0.0
    %284 = vmatpush1.msra.mxu0 0.0
    %285 = vmatprep.subr.mxu0 0.0
    %286 = vmatpush1.msra.mxu0 0.0
    %287 = vmatprep.subr.mxu0 0.0
    %288 = vmatpush1.msra.mxu0 0.0
    %289 = vmatprep.subr.mxu0 0.0
    %290 = vmatpush1.msra.mxu0 0.0
    %291 = vmatprep.subr.mxu0 0.0
    %292 = vmatpush1.msra.mxu0 0.0
    %293 = vmatprep.subr.mxu0 0.0
    %294 = vmatpush1.msra.mxu0 0.0
    %295 = vmatprep.subr.mxu0 0.0
    %296 = vmatpush1.msra.mxu0 0.0
    %297 = vmatprep.subr.mxu0 0.0
    %298 = vmatpush1.msra.mxu0 0.0
    %299 = vmatprep.subr.mxu0 0.0
    %300 = vmatpush1.msra.mxu0 0.0
    %301 = vmatprep.subr.mxu0 0.0
    %302 = vmatpush1.msra.mxu0 0.0
    %303 = vmatprep.subr.mxu0 0.0
    %304 = vmatpush1.msra.mxu0 0.0
    %305 = vmatprep.subr.mxu0 0.0
    %306 = vmatpush1.msra.mxu0 0.0
    %307 = vmatprep.subr.mxu0 0.0
    %308 = vmatpush1.msra.mxu0 0.0
    %309 = vmatprep.subr.mxu0 0.0
    %310 = vmatpush1.msra.mxu0 0.0
    %311 = vmatprep.subr.mxu0 0.0
    %312 = vmatpush1.msra.mxu0 0.0
    %313 = vmatprep.subr.mxu0 0.0
    %314 = vmatpush1.msra.mxu0 0.0
    %315 = vmatprep.subr.mxu0 0.0
    %316 = vmatpush1.msra.mxu0 0.0
    %317 = vmatprep.subr.mxu0 0.0
    %318 = vmatpush1.msra.mxu0 0.0
    %319 = vmatprep.mubr.f32.mxu0 0.0
    %320 = vmatmul.mubr.f32.gmra.mrb[0].mxu0 %v253
    %v321 = vpop.f32.mrb[0].mxu0
    %v322 = vadd.f32 %v234, %v321
    %v323 = vpop.f32.mrb[0].mxu0
    %v324 = vadd.f32 %v238, %v323
    %325 = vdwg.mxu0
    %326 = vmatprep.subr.mxu0 %v216
    %327 = vmatpush1.msra.mxu0 %v215
    %328 = vmatprep.subr.mxu0 %v220
    %329 = vmatpush1.msra.mxu0 %v219
    %330 = vmatprep.subr.mxu0 %v224
    %331 = vmatpush1.msra.mxu0 %v223
    %332 = vmatprep.subr.mxu0 %v228
    %333 = vmatpush1.msra.mxu0 %v227
    %334 = vmatprep.subr.mxu0 0.0
    %335 = vmatpush1.msra.mxu0 0.0
    %336 = vmatprep.subr.mxu0 0.0
    %337 = vmatpush1.msra.mxu0 0.0
    %338 = vmatprep.subr.mxu0 0.0
    %339 = vmatpush1.msra.mxu0 0.0
    %340 = vmatprep.subr.mxu0 0.0
    %341 = vmatpush1.msra.mxu0 0.0
    %342 = vmatprep.subr.mxu0 0.0
    %343 = vmatpush1.msra.mxu0 0.0
    %344 = vmatprep.subr.mxu0 0.0
    %345 = vmatpush1.msra.mxu0 0.0
    %346 = vmatprep.subr.mxu0 0.0
    %347 = vmatpush1.msra.mxu0 0.0
    %348 = vmatprep.subr.mxu0 0.0
    %349 = vmatpush1.msra.mxu0 0.0
    %350 = vmatprep.subr.mxu0 0.0
    %351 = vmatpush1.msra.mxu0 0.0
    %352 = vmatprep.subr.mxu0 0.0
    %353 = vmatpush1.msra.mxu0 0.0
    %354 = vmatprep.subr.mxu0 0.0
    %355 = vmatpush1.msra.mxu0 0.0
    %356 = vmatprep.subr.mxu0 0.0
    %357 = vmatpush1.msra.mxu0 0.0
    %358 = vmatprep.subr.mxu0 0.0
    %359 = vmatpush1.msra.mxu0 0.0
    %360 = vmatprep.subr.mxu0 0.0
    %361 = vmatpush1.msra.mxu0 0.0
    %362 = vmatprep.subr.mxu0 0.0
    %363 = vmatpush1.msra.mxu0 0.0
    %364 = vmatprep.subr.mxu0 0.0
    %365 = vmatpush1.msra.mxu0 0.0
    %366 = vmatprep.subr.mxu0 0.0
    %367 = vmatpush1.msra.mxu0 0.0
    %368 = vmatprep.subr.mxu0 0.0
    %369 = vmatpush1.msra.mxu0 0.0
    %370 = vmatprep.subr.mxu0 0.0
    %371 = vmatpush1.msra.mxu0 0.0
    %372 = vmatprep.subr.mxu0 0.0
    %373 = vmatpush1.msra.mxu0 0.0
    %374 = vmatprep.subr.mxu0 0.0
    %375 = vmatpush1.msra.mxu0 0.0
    %376 = vmatprep.subr.mxu0 0.0
    %377 = vmatpush1.msra.mxu0 0.0
    %378 = vmatprep.subr.mxu0 0.0
    %379 = vmatpush1.msra.mxu0 0.0
    %380 = vmatprep.subr.mxu0 0.0
    %381 = vmatpush1.msra.mxu0 0.0
    %382 = vmatprep.subr.mxu0 0.0
    %383 = vmatpush1.msra.mxu0 0.0
    %384 = vmatprep.subr.mxu0 0.0
    %385 = vmatpush1.msra.mxu0 0.0
    %386 = vmatprep.subr.mxu0 0.0
    %387 = vmatpush1.msra.mxu0 0.0
    %388 = vmatprep.subr.mxu0 0.0
    %389 = vmatpush1.msra.mxu0 0.0
    %390 = vmatprep.mubr.f32.mxu0 0.0
    %391 = vmatmul.mubr.f32.gmra.mrb[0].mxu0 %v253
    %v392 = vpop.f32.mrb[0].mxu0
    %v393 = vadd.f32 %v242, %v392
    %v394 = vpop.f32.mrb[0].mxu0
    %v395 = vadd.f32 %v246, %v394
    %396 = vdwg.mxu0
    %v397 = vmax.f32 %v322, 0.0
    %v398 = vmax.f32 %v324, 0.0
    %v399 = vmax.f32 %v393, 0.0
    %v400 = vmax.f32 %v395, 0.0
    %v401 = vld [vmem:[#allocation2] sm:$0xff]
    %v402 = vld [vmem:[#allocation2 + $0x8] sm:$0xff]
    %v403 = vld [vmem:[#allocation2 + $0x10] sm:$0xff]
    %v404 = vld [vmem:[#allocation2 + $0x18] sm:$0xff]
    %v405 = vld [vmem:[#allocation2 + $0x20] sm:$0xff]
    %v406 = vld [vmem:[#allocation2 + $0x28] sm:$0xff]
    %v407 = vld [vmem:[#allocation2 + $0x30] sm:$0xff]
    %v408 = vld [vmem:[#allocation2 + $0x38] sm:$0xff]
    %v409 = vld [vmem:[#allocation2 + $0x40] sm:$0xff]
    %v410 = vld [vmem:[#allocation2 + $0x48] sm:$0xff]
    %v411 = vld [vmem:[#allocation2 + $0x50] sm:$0xff]
    %v412 = vld [vmem:[#allocation2 + $0x58] sm:$0xff]
    %v413 = vld [vmem:[#allocation2 + $0x60] sm:$0xff]
    %v414 = vld [vmem:[#allocation2 + $0x68] sm:$0xff]
    %v415 = vld [vmem:[#allocation2 + $0x70] sm:$0xff]
    %v416 = vld [vmem:[#allocation2 + $0x78] sm:$0xff]
    %v417 = vld [vmem:[#allocation2 + $0x80] sm:$0xff]
    %v418 = vld [vmem:[#allocation2 + $0x88] sm:$0xff]
    %v419 = vld [vmem:[#allocation2 + $0x90] sm:$0xff]
    %v420 = vld [vmem:[#allocation2 + $0x98] sm:$0xff]
    %v421 = vld [vmem:[#allocation2 + $0xa0] sm:$0xff]
    %v422 = vld [vmem:[#allocation2 + $0xa8] sm:$0xff]
    %v423 = vld [vmem:[#allocation2 + $0xb0] sm:$0xff]
    %v424 = vld [vmem:[#allocation2 + $0xb8] sm:$0xff]
    %v425 = vld [vmem:[#allocation2 + $0xc0] sm:$0xff]
    %v426 = vld [vmem:[#allocation2 + $0xc8] sm:$0xff]
    %v427 = vld [vmem:[#allocation2 + $0xd0] sm:$0xff]
    %v428 = vld [vmem:[#allocation2 + $0xd8] sm:$0xff]
    %v429 = vld [vmem:[#allocation2 + $0xe0] sm:$0xff]
    %v430 = vld [vmem:[#allocation2 + $0xe8] sm:$0xff]
    %v431 = vld [vmem:[#allocation2 + $0xf0] sm:$0xff]
    %v432 = vld [vmem:[#allocation2 + $0xf8] sm:$0xff]
    %v433 = vld [vmem:[#allocation2 + $0x100] sm:$0xff]
    %v434 = vld [vmem:[#allocation2 + $0x108] sm:$0xff]
    %v435 = vld [vmem:[#allocation2 + $0x110] sm:$0xff]
    %v436 = vld [vmem:[#allocation2 + $0x118] sm:$0xff]
    %v437 = vld [vmem:[#allocation2 + $0x120] sm:$0xff]
    %v438 = vld [vmem:[#allocation2 + $0x128] sm:$0xff]
    %v439 = vld [vmem:[#allocation2 + $0x130] sm:$0xff]
    %v440 = vld [vmem:[#allocation2 + $0x138] sm:$0xff]
    %v441 = vld [vmem:[#allocation2 + $0x140] sm:$0xff]
    %v442 = vld [vmem:[#allocation2 + $0x148] sm:$0xff]
    %v443 = vld [vmem:[#allocation2 + $0x150] sm:$0xff]
    %v444 = vld [vmem:[#allocation2 + $0x158] sm:$0xff]
    %v445 = vld [vmem:[#allocation2 + $0x160] sm:$0xff]
    %v446 = vld [vmem:[#allocation2 + $0x168] sm:$0xff]
    %v447 = vld [vmem:[#allocation2 + $0x170] sm:$0xff]
    %v448 = vld [vmem:[#allocation2 + $0x178] sm:$0xff]
    %v449 = vld [vmem:[#allocation2 + $0x180] sm:$0xff]
    %v450 = vld [vmem:[#allocation2 + $0x188] sm:$0xff]
    %v451 = vld [vmem:[#allocation2 + $0x190] sm:$0xff]
    %v452 = vld [vmem:[#allocation2 + $0x198] sm:$0xff]
    %v453 = vld [vmem:[#allocation2 + $0x1a0] sm:$0xff]
    %v454 = vld [vmem:[#allocation2 + $0x1a8] sm:$0xff]
    %v455 = vld [vmem:[#allocation2 + $0x1b0] sm:$0xff]
    %v456 = vld [vmem:[#allocation2 + $0x1b8] sm:$0xff]
    %v457 = vld [vmem:[#allocation2 + $0x1c0] sm:$0xff]
    %v458 = vld [vmem:[#allocation2 + $0x1c8] sm:$0xff]
    %v459 = vld [vmem:[#allocation2 + $0x1d0] sm:$0xff]
    %v460 = vld [vmem:[#allocation2 + $0x1d8] sm:$0xff]
    %v461 = vld [vmem:[#allocation2 + $0x1e0] sm:$0xff]
    %v462 = vld [vmem:[#allocation2 + $0x1e8] sm:$0xff]
    %v463 = vld [vmem:[#allocation2 + $0x1f0] sm:$0xff]
    %v464 = vld [vmem:[#allocation2 + $0x1f8] sm:$0xff]
    %v465 = vld [vmem:[#allocation2 + $0x200] sm:$0xff]
    %v466 = vld [vmem:[#allocation2 + $0x208] sm:$0xff]
    %v467 = vld [vmem:[#allocation2 + $0x210] sm:$0xff]
    %v468 = vld [vmem:[#allocation2 + $0x218] sm:$0xff]
    %v469 = vld [vmem:[#allocation2 + $0x220] sm:$0xff]
    %v470 = vld [vmem:[#allocation2 + $0x228] sm:$0xff]
    %v471 = vld [vmem:[#allocation2 + $0x230] sm:$0xff]
    %v472 = vld [vmem:[#allocation2 + $0x238] sm:$0xff]
    %v473 = vld [vmem:[#allocation2 + $0x240] sm:$0xff]
    %v474 = vld [vmem:[#allocation2 + $0x248] sm:$0xff]
    %v475 = vld [vmem:[#allocation2 + $0x250] sm:$0xff]
    %v476 = vld [vmem:[#allocation2 + $0x258] sm:$0xff]
    %v477 = vld [vmem:[#allocation2 + $0x260] sm:$0xff]
    %v478 = vld [vmem:[#allocation2 + $0x268] sm:$0xff]
    %v479 = vld [vmem:[#allocation2 + $0x270] sm:$0xff]
    %v480 = vld [vmem:[#allocation2 + $0x278] sm:$0xff]
    %v481 = vld [vmem:[#allocation2 + $0x280] sm:$0xff]
    %v482 = vld [vmem:[#allocation2 + $0x288] sm:$0xff]
    %v483 = vld [vmem:[#allocation2 + $0x290] sm:$0xff]
    %v484 = vld [vmem:[#allocation2 + $0x298] sm:$0xff]
    %v485 = vld [vmem:[#allocation2 + $0x2a0] sm:$0xff]
    %v486 = vld [vmem:[#allocation2 + $0x2a8] sm:$0xff]
    %v487 = vld [vmem:[#allocation2 + $0x2b0] sm:$0xff]
    %v488 = vld [vmem:[#allocation2 + $0x2b8] sm:$0xff]
    %v489 = vld [vmem:[#allocation2 + $0x2c0] sm:$0xff]
    %v490 = vld [vmem:[#allocation2 + $0x2c8] sm:$0xff]
    %v491 = vld [vmem:[#allocation2 + $0x2d0] sm:$0xff]
    %v492 = vld [vmem:[#allocation2 + $0x2d8] sm:$0xff]
    %v493 = vld [vmem:[#allocation2 + $0x2e0] sm:$0xff]
    %v494 = vld [vmem:[#allocation2 + $0x2e8] sm:$0xff]
    %v495 = vld [vmem:[#allocation2 + $0x2f0] sm:$0xff]
    %v496 = vld [vmem:[#allocation2 + $0x2f8] sm:$0xff]
    %v497 = vld [vmem:[#allocation2 + $0x300] sm:$0xff]
    %v498 = vld [vmem:[#allocation2 + $0x308] sm:$0xff]
    %v499 = vld [vmem:[#allocation2 + $0x310] sm:$0xff]
    %v500 = vld [vmem:[#allocation2 + $0x318] sm:$0xff]
    %v501 = vld [vmem:[#allocation2 + $0x320] sm:$0xff]
    %v502 = vld [vmem:[#allocation2 + $0x328] sm:$0xff]
    %v503 = vld [vmem:[#allocation2 + $0x330] sm:$0xff]
    %v504 = vld [vmem:[#allocation2 + $0x338] sm:$0xff]
    %v505 = vld [vmem:[#allocation2 + $0x340] sm:$0xff]
    %v506 = vld [vmem:[#allocation2 + $0x348] sm:$0xff]
    %v507 = vld [vmem:[#allocation2 + $0x350] sm:$0xff]
    %v508 = vld [vmem:[#allocation2 + $0x358] sm:$0xff]
    %v509 = vld [vmem:[#allocation2 + $0x360] sm:$0xff]
    %v510 = vld [vmem:[#allocation2 + $0x368] sm:$0xff]
    %v511 = vld [vmem:[#allocation2 + $0x370] sm:$0xff]
    %v512 = vld [vmem:[#allocation2 + $0x378] sm:$0xff]
    %v513 = vld [vmem:[#allocation2 + $0x380] sm:$0xff]
    %v514 = vld [vmem:[#allocation2 + $0x388] sm:$0xff]
    %v515 = vld [vmem:[#allocation2 + $0x390] sm:$0xff]
    %v516 = vld [vmem:[#allocation2 + $0x398] sm:$0xff]
    %v517 = vld [vmem:[#allocation2 + $0x3a0] sm:$0xff]
    %v518 = vld [vmem:[#allocation2 + $0x3a8] sm:$0xff]
    %v519 = vld [vmem:[#allocation2 + $0x3b0] sm:$0xff]
    %v520 = vld [vmem:[#allocation2 + $0x3b8] sm:$0xff]
    %v521 = vld [vmem:[#allocation2 + $0x3c0] sm:$0xff]
    %v522 = vld [vmem:[#allocation2 + $0x3c8] sm:$0xff]
    %v523 = vld [vmem:[#allocation2 + $0x3d0] sm:$0xff]
    %v524 = vld [vmem:[#allocation2 + $0x3d8] sm:$0xff]
    %v525 = vld [vmem:[#allocation2 + $0x3e0] sm:$0xff]
    %v526 = vld [vmem:[#allocation2 + $0x3e8] sm:$0xff]
    %v527 = vld [vmem:[#allocation2 + $0x3f0] sm:$0xff]
    %v528 = vld [vmem:[#allocation2 + $0x3f8] sm:$0xff]
    %v529 = vld [vmem:[%s8] sm:$0x3]
    %v531 = vlaneseq
    %v532 = vshrl.u32 %v531, 7
    %v533 = vsub.s32 0, %v532
    %v534 = vrot.slane %v529, %v533
    %v535 = vlaneseq
    %v536 = vshrl.u32 %v535, 7
    %v537 = vsub.s32 1, %v536
    %v538 = vrot.slane %v529, %v537
    %541 = vmatprep.subr.mxu0 %v402
    %542 = vmatpush1.msra.mxu0 %v401
    %543 = vmatprep.subr.mxu0 %v404
    %544 = vmatpush1.msra.mxu0 %v403
    %545 = vmatprep.subr.mxu0 %v406
    %546 = vmatpush1.msra.mxu0 %v405
    %547 = vmatprep.subr.mxu0 %v408
    %548 = vmatpush1.msra.mxu0 %v407
    %549 = vmatprep.subr.mxu0 %v410
    %550 = vmatpush1.msra.mxu0 %v409
    %551 = vmatprep.subr.mxu0 %v412
    %552 = vmatpush1.msra.mxu0 %v411
    %553 = vmatprep.subr.mxu0 %v414
    %554 = vmatpush1.msra.mxu0 %v413
    %555 = vmatprep.subr.mxu0 %v416
    %556 = vmatpush1.msra.mxu0 %v415
    %557 = vmatprep.subr.mxu0 %v418
    %558 = vmatpush1.msra.mxu0 %v417
    %559 = vmatprep.subr.mxu0 %v420
    %560 = vmatpush1.msra.mxu0 %v419
    %561 = vmatprep.subr.mxu0 %v422
    %562 = vmatpush1.msra.mxu0 %v421
    %563 = vmatprep.subr.mxu0 %v424
    %564 = vmatpush1.msra.mxu0 %v423
    %565 = vmatprep.subr.mxu0 %v426
    %566 = vmatpush1.msra.mxu0 %v425
    %567 = vmatprep.subr.mxu0 %v428
    %568 = vmatpush1.msra.mxu0 %v427
    %569 = vmatprep.subr.mxu0 %v430
    %570 = vmatpush1.msra.mxu0 %v429
    %571 = vmatprep.subr.mxu0 %v432
    %572 = vmatpush1.msra.mxu0 %v431
    %573 = vmatprep.subr.mxu0 %v434
    %574 = vmatpush1.msra.mxu0 %v433
    %575 = vmatprep.subr.mxu0 %v436
    %576 = vmatpush1.msra.mxu0 %v435
    %577 = vmatprep.subr.mxu0 %v438
    %578 = vmatpush1.msra.mxu0 %v437
    %579 = vmatprep.subr.mxu0 %v440
    %580 = vmatpush1.msra.mxu0 %v439
    %581 = vmatprep.subr.mxu0 %v442
    %582 = vmatpush1.msra.mxu0 %v441
    %583 = vmatprep.subr.mxu0 %v444
    %584 = vmatpush1.msra.mxu0 %v443
    %585 = vmatprep.subr.mxu0 %v446
    %586 = vmatpush1.msra.mxu0 %v445
    %587 = vmatprep.subr.mxu0 %v448
    %588 = vmatpush1.msra.mxu0 %v447
    %589 = vmatprep.subr.mxu0 %v450
    %590 = vmatpush1.msra.mxu0 %v449
    %591 = vmatprep.subr.mxu0 %v452
    %592 = vmatpush1.msra.mxu0 %v451
    %593 = vmatprep.subr.mxu0 %v454
    %594 = vmatpush1.msra.mxu0 %v453
    %595 = vmatprep.subr.mxu0 %v456
    %596 = vmatpush1.msra.mxu0 %v455
    %597 = vmatprep.subr.mxu0 %v458
    %598 = vmatpush1.msra.mxu0 %v457
    %599 = vmatprep.subr.mxu0 %v460
    %600 = vmatpush1.msra.mxu0 %v459
    %601 = vmatprep.subr.mxu0 %v462
    %602 = vmatpush1.msra.mxu0 %v461
    %603 = vmatprep.subr.mxu0 %v464
    %604 = vmatpush1.msra.mxu0 %v463
    %605 = vmatprep.mubr.f32.mxu0 %v398
    %606 = vmatmul.mubr.f32.gmra.mrb[0].mxu0 %v397
    %v607 = vpop.f32.mrb[0].mxu0
    %v608 = vadd.f32 %v534, %v607
    %v609 = vpop.f32.mrb[0].mxu0
    %v610 = vadd.f32 %v538, %v609
    %611 = vdwg.mxu0
    %612 = vmatprep.subr.mxu0 %v466
    %613 = vmatpush1.msra.mxu0 %v465
    %614 = vmatprep.subr.mxu0 %v468
    %615 = vmatpush1.msra.mxu0 %v467
    %616 = vmatprep.subr.mxu0 %v470
    %617 = vmatpush1.msra.mxu0 %v469
    %618 = vmatprep.subr.mxu0 %v472
    %619 = vmatpush1.msra.mxu0 %v471
    %620 = vmatprep.subr.mxu0 %v474
    %621 = vmatpush1.msra.mxu0 %v473
    %622 = vmatprep.subr.mxu0 %v476
    %623 = vmatpush1.msra.mxu0 %v475
    %624 = vmatprep.subr.mxu0 %v478
    %625 = vmatpush1.msra.mxu0 %v477
    %626 = vmatprep.subr.mxu0 %v480
    %627 = vmatpush1.msra.mxu0 %v479
    %628 = vmatprep.subr.mxu0 %v482
    %629 = vmatpush1.msra.mxu0 %v481
    %630 = vmatprep.subr.mxu0 %v484
    %631 = vmatpush1.msra.mxu0 %v483
    %632 = vmatprep.subr.mxu0 %v486
    %633 = vmatpush1.msra.mxu0 %v485
    %634 = vmatprep.subr.mxu0 %v488
    %635 = vmatpush1.msra.mxu0 %v487
    %636 = vmatprep.subr.mxu0 %v490
    %637 = vmatpush1.msra.mxu0 %v489
    %638 = vmatprep.subr.mxu0 %v492
    %639 = vmatpush1.msra.mxu0 %v491
    %640 = vmatprep.subr.mxu0 %v494
    %641 = vmatpush1.msra.mxu0 %v493
    %642 = vmatprep.subr.mxu0 %v496
    %643 = vmatpush1.msra.mxu0 %v495
    %644 = vmatprep.subr.mxu0 %v498
    %645 = vmatpush1.msra.mxu0 %v497
    %646 = vmatprep.subr.mxu0 %v500
    %647 = vmatpush1.msra.mxu0 %v499
    %648 = vmatprep.subr.mxu0 %v502
    %649 = vmatpush1.msra.mxu0 %v501
    %650 = vmatprep.subr.mxu0 %v504
    %651 = vmatpush1.msra.mxu0 %v503
    %652 = vmatprep.subr.mxu0 %v506
    %653 = vmatpush1.msra.mxu0 %v505
    %654 = vmatprep.subr.mxu0 %v508
    %655 = vmatpush1.msra.mxu0 %v507
    %656 = vmatprep.subr.mxu0 %v510
    %657 = vmatpush1.msra.mxu0 %v509
    %658 = vmatprep.subr.mxu0 %v512
    %659 = vmatpush1.msra.mxu0 %v511
    %660 = vmatprep.subr.mxu0 %v514
    %661 = vmatpush1.msra.mxu0 %v513
    %662 = vmatprep.subr.mxu0 %v516
    %663 = vmatpush1.msra.mxu0 %v515
    %664 = vmatprep.subr.mxu0 %v518
    %665 = vmatpush1.msra.mxu0 %v517
    %666 = vmatprep.subr.mxu0 %v520
    %667 = vmatpush1.msra.mxu0 %v519
    %668 = vmatprep.subr.mxu0 %v522
    %669 = vmatpush1.msra.mxu0 %v521
    %670 = vmatprep.subr.mxu0 %v524
    %671 = vmatpush1.msra.mxu0 %v523
    %672 = vmatprep.subr.mxu0 %v526
    %673 = vmatpush1.msra.mxu0 %v525
    %674 = vmatprep.subr.mxu0 %v528
    %675 = vmatpush1.msra.mxu0 %v527
    %676 = vmatprep.mubr.f32.mxu0 %v400
    %677 = vmatmul.mubr.f32.gmra.mrb[0].mxu0 %v399
    %v678 = vpop.f32.mrb[0].mxu0
    %v679 = vadd.f32 %v608, %v678
    %v680 = vpop.f32.mrb[0].mxu0
    %v681 = vadd.f32 %v610, %v680
    %682 = vdwg.mxu0
    %v683 = vmax.f32 %v679, 0.0
    %v684 = vmax.f32 %v681, 0.0
    %v685 = vld [vmem:[#allocation5] sm:$0xff]
    %v686 = vld [vmem:[#allocation5 + $0x8] sm:$0xff]
    %v687 = vld [vmem:[#allocation5 + $0x10] sm:$0xff]
    %v688 = vld [vmem:[#allocation5 + $0x18] sm:$0xff]
    %v689 = vld [vmem:[#allocation5 + $0x20] sm:$0xff]
    %v690 = vld [vmem:[#allocation5 + $0x28] sm:$0xff]
    %v691 = vld [vmem:[#allocation5 + $0x30] sm:$0xff]
    %v692 = vld [vmem:[#allocation5 + $0x38] sm:$0xff]
    %v693 = vld [vmem:[#allocation5 + $0x40] sm:$0xff]
    %v694 = vld [vmem:[#allocation5 + $0x48] sm:$0xff]
    %v695 = vld [vmem:[#allocation5 + $0x50] sm:$0xff]
    %v696 = vld [vmem:[#allocation5 + $0x58] sm:$0xff]
    %v697 = vld [vmem:[#allocation5 + $0x60] sm:$0xff]
    %v698 = vld [vmem:[#allocation5 + $0x68] sm:$0xff]
    %v699 = vld [vmem:[#allocation5 + $0x70] sm:$0xff]
    %v700 = vld [vmem:[#allocation5 + $0x78] sm:$0xff]
    %v701 = vld [vmem:[#allocation5 + $0x80] sm:$0xff]
    %v702 = vld [vmem:[#allocation5 + $0x88] sm:$0xff]
    %v703 = vld [vmem:[#allocation5 + $0x90] sm:$0xff]
    %v704 = vld [vmem:[#allocation5 + $0x98] sm:$0xff]
    %v705 = vld [vmem:[#allocation5 + $0xa0] sm:$0xff]
    %v706 = vld [vmem:[#allocation5 + $0xa8] sm:$0xff]
    %v707 = vld [vmem:[#allocation5 + $0xb0] sm:$0xff]
    %v708 = vld [vmem:[#allocation5 + $0xb8] sm:$0xff]
    %v709 = vld [vmem:[#allocation5 + $0xc0] sm:$0xff]
    %v710 = vld [vmem:[#allocation5 + $0xc8] sm:$0xff]
    %v711 = vld [vmem:[#allocation5 + $0xd0] sm:$0xff]
    %v712 = vld [vmem:[#allocation5 + $0xd8] sm:$0xff]
    %v713 = vld [vmem:[#allocation5 + $0xe0] sm:$0xff]
    %v714 = vld [vmem:[#allocation5 + $0xe8] sm:$0xff]
    %v715 = vld [vmem:[#allocation5 + $0xf0] sm:$0xff]
    %v716 = vld [vmem:[#allocation5 + $0xf8] sm:$0xff]
    %v717 = vld [vmem:[%s10] sm:$0x1]
    %v719 = vlaneseq
    %v720 = vshrl.u32 %v719, 7
    %v721 = vsub.s32 0, %v720
    %v722 = vrot.slane %v717, %v721
    %724 = vmatprep.subr.mxu0 0.0
    %725 = vmatpush1.msra.mxu0 %v685
    %726 = vmatprep.subr.mxu0 0.0
    %727 = vmatpush1.msra.mxu0 %v686
    %728 = vmatprep.subr.mxu0 0.0
    %729 = vmatpush1.msra.mxu0 %v687
    %730 = vmatprep.subr.mxu0 0.0
    %731 = vmatpush1.msra.mxu0 %v688
    %732 = vmatprep.subr.mxu0 0.0
    %733 = vmatpush1.msra.mxu0 %v689
    %734 = vmatprep.subr.mxu0 0.0
    %735 = vmatpush1.msra.mxu0 %v690
    %736 = vmatprep.subr.mxu0 0.0
    %737 = vmatpush1.msra.mxu0 %v691
    %738 = vmatprep.subr.mxu0 0.0
    %739 = vmatpush1.msra.mxu0 %v692
    %740 = vmatprep.subr.mxu0 0.0
    %741 = vmatpush1.msra.mxu0 %v693
    %742 = vmatprep.subr.mxu0 0.0
    %743 = vmatpush1.msra.mxu0 %v694
    %744 = vmatprep.subr.mxu0 0.0
    %745 = vmatpush1.msra.mxu0 %v695
    %746 = vmatprep.subr.mxu0 0.0
    %747 = vmatpush1.msra.mxu0 %v696
    %748 = vmatprep.subr.mxu0 0.0
    %749 = vmatpush1.msra.mxu0 %v697
    %750 = vmatprep.subr.mxu0 0.0
    %751 = vmatpush1.msra.mxu0 %v698
    %752 = vmatprep.subr.mxu0 0.0
    %753 = vmatpush1.msra.mxu0 %v699
    %754 = vmatprep.subr.mxu0 0.0
    %755 = vmatpush1.msra.mxu0 %v700
    %756 = vmatprep.subr.mxu0 0.0
    %757 = vmatpush1.msra.mxu0 %v701
    %758 = vmatprep.subr.mxu0 0.0
    %759 = vmatpush1.msra.mxu0 %v702
    %760 = vmatprep.subr.mxu0 0.0
    %761 = vmatpush1.msra.mxu0 %v703
    %762 = vmatprep.subr.mxu0 0.0
    %763 = vmatpush1.msra.mxu0 %v704
    %764 = vmatprep.subr.mxu0 0.0
    %765 = vmatpush1.msra.mxu0 %v705
    %766 = vmatprep.subr.mxu0 0.0
    %767 = vmatpush1.msra.mxu0 %v706
    %768 = vmatprep.subr.mxu0 0.0
    %769 = vmatpush1.msra.mxu0 %v707
    %770 = vmatprep.subr.mxu0 0.0
    %771 = vmatpush1.msra.mxu0 %v708
    %772 = vmatprep.subr.mxu0 0.0
    %773 = vmatpush1.msra.mxu0 %v709
    %774 = vmatprep.subr.mxu0 0.0
    %775 = vmatpush1.msra.mxu0 %v710
    %776 = vmatprep.subr.mxu0 0.0
    %777 = vmatpush1.msra.mxu0 %v711
    %778 = vmatprep.subr.mxu0 0.0
    %779 = vmatpush1.msra.mxu0 %v712
    %780 = vmatprep.subr.mxu0 0.0
    %781 = vmatpush1.msra.mxu0 %v713
    %782 = vmatprep.subr.mxu0 0.0
    %783 = vmatpush1.msra.mxu0 %v714
    %784 = vmatprep.subr.mxu0 0.0
    %785 = vmatpush1.msra.mxu0 %v715
    %786 = vmatprep.subr.mxu0 0.0
    %787 = vmatpush1.msra.mxu0 %v716
    %788 = vmatprep.mubr.f32.mxu0 %v684
    %789 = vmatmul.mubr.f32.gmra.mrb[0].mxu0 %v683
    %v790 = vpop.f32.mrb[0].mxu0
    %v791 = vadd.f32 %v722, %v790
    %v792 = vpop.f32.mrb[0].mxu0
    %793 = vdwg.mxu0
    %v794 = vmax.f32 %v791, 0.0
    %v795 = vld [vmem:[%s11] sm:$0xff]
    %v796 = vld [vmem:[%s11 + $0x8] sm:$0xff]
    %v797 = vld [vmem:[%s11 + $0x10] sm:$0xff]
    %v798 = vld [vmem:[%s11 + $0x18] sm:$0xff]
    %v799 = vld [vmem:[%s11 + $0x20] sm:$0xff]
    %v800 = vld [vmem:[%s11 + $0x28] sm:$0xff]
    %v801 = vld [vmem:[%s11 + $0x30] sm:$0xff]
    %v802 = vld [vmem:[%s11 + $0x38] sm:$0xff]
    %v803 = vld [vmem:[%s11 + $0x40] sm:$0xff]
    %v804 = vld [vmem:[%s11 + $0x48] sm:$0xff]
    %v805 = vld [vmem:[%s11 + $0x50] sm:$0xff]
    %v806 = vld [vmem:[%s11 + $0x58] sm:$0xff]
    %v807 = vld [vmem:[%s11 + $0x60] sm:$0xff]
    %v808 = vld [vmem:[%s11 + $0x68] sm:$0xff]
    %v809 = vld [vmem:[%s11 + $0x70] sm:$0xff]
    %v810 = vld [vmem:[%s11 + $0x78] sm:$0xff]
    %v811 = vld [vmem:[%s12] sm:$0x1]
    %v813 = vlaneseq
    %v814 = vshrl.u32 %v813, 7
    %v815 = vsub.s32 0, %v814
    %v816 = vrot.slane %v811, %v815
    %818 = vmatprep.subr.mxu0 0.0
    %819 = vmatpush1.msra.mxu0 %v795
    %820 = vmatprep.subr.mxu0 0.0
    %821 = vmatpush1.msra.mxu0 %v796
    %822 = vmatprep.subr.mxu0 0.0
    %823 = vmatpush1.msra.mxu0 %v797
    %824 = vmatprep.subr.mxu0 0.0
    %825 = vmatpush1.msra.mxu0 %v798
    %826 = vmatprep.subr.mxu0 0.0
    %827 = vmatpush1.msra.mxu0 %v799
    %828 = vmatprep.subr.mxu0 0.0
    %829 = vmatpush1.msra.mxu0 %v800
    %830 = vmatprep.subr.mxu0 0.0
    %831 = vmatpush1.msra.mxu0 %v801
    %832 = vmatprep.subr.mxu0 0.0
    %833 = vmatpush1.msra.mxu0 %v802
    %834 = vmatprep.subr.mxu0 0.0
    %835 = vmatpush1.msra.mxu0 %v803
    %836 = vmatprep.subr.mxu0 0.0
    %837 = vmatpush1.msra.mxu0 %v804
    %838 = vmatprep.subr.mxu0 0.0
    %839 = vmatpush1.msra.mxu0 %v805
    %840 = vmatprep.subr.mxu0 0.0
    %841 = vmatpush1.msra.mxu0 %v806
    %842 = vmatprep.subr.mxu0 0.0
    %843 = vmatpush1.msra.mxu0 %v807
    %844 = vmatprep.subr.mxu0 0.0
    %845 = vmatpush1.msra.mxu0 %v808
    %846 = vmatprep.subr.mxu0 0.0
    %847 = vmatpush1.msra.mxu0 %v809
    %848 = vmatprep.subr.mxu0 0.0
    %849 = vmatpush1.msra.mxu0 %v810
    %850 = vmatprep.subr.mxu0 0.0
    %851 = vmatpush1.msra.mxu0 0.0
    %852 = vmatprep.subr.mxu0 0.0
    %853 = vmatpush1.msra.mxu0 0.0
    %854 = vmatprep.subr.mxu0 0.0
    %855 = vmatpush1.msra.mxu0 0.0
    %856 = vmatprep.subr.mxu0 0.0
    %857 = vmatpush1.msra.mxu0 0.0
    %858 = vmatprep.subr.mxu0 0.0
    %859 = vmatpush1.msra.mxu0 0.0
    %860 = vmatprep.subr.mxu0 0.0
    %861 = vmatpush1.msra.mxu0 0.0
    %862 = vmatprep.subr.mxu0 0.0
    %863 = vmatpush1.msra.mxu0 0.0
    %864 = vmatprep.subr.mxu0 0.0
    %865 = vmatpush1.msra.mxu0 0.0
    %866 = vmatprep.subr.mxu0 0.0
    %867 = vmatpush1.msra.mxu0 0.0
    %868 = vmatprep.subr.mxu0 0.0
    %869 = vmatpush1.msra.mxu0 0.0
    %870 = vmatprep.subr.mxu0 0.0
    %871 = vmatpush1.msra.mxu0 0.0
    %872 = vmatprep.subr.mxu0 0.0
    %873 = vmatpush1.msra.mxu0 0.0
    %874 = vmatprep.subr.mxu0 0.0
    %875 = vmatpush1.msra.mxu0 0.0
    %876 = vmatprep.subr.mxu0 0.0
    %877 = vmatpush1.msra.mxu0 0.0
    %878 = vmatprep.subr.mxu0 0.0
    %879 = vmatpush1.msra.mxu0 0.0
    %880 = vmatprep.subr.mxu0 0.0
    %881 = vmatpush1.msra.mxu0 0.0
    %882 = vmatprep.mubr.f32.mxu0 0.0
    %883 = vmatmul.mubr.f32.gmra.mrb[0].mxu0 %v794
    %v884 = vpop.f32.mrb[0].mxu0
    %v885 = vadd.f32 %v816, %v884
    %v886 = vpop.f32.mrb[0].mxu0
    %887 = vdwg.mxu0
    %v890 = vsel %vm156, %v128, %v121
    %892 = vrot.lane.b32.xlu0 %v890, 4
    %v893 = vpop.permute.xlu0 %892
    %895 = vrot.lane.b32.xlu0 %v890, 8
    %v896 = vpop.permute.xlu0 %895
    %898 = vrot.lane.b32.xlu0 %v890, 12
    %v899 = vpop.permute.xlu0 %898
    %v901 = vsel %vm75, %v890, %v893
    %v902 = vsel %vm201, %v901, %v896
    %v903 = vsel %vm203, %v902, %v899
    %v906 = vsel %vm156, %v92, %v91
    %908 = vrot.lane.b32.xlu0 %v906, 4
    %v909 = vpop.permute.xlu0 %908
    %911 = vrot.lane.b32.xlu0 %v906, 8
    %v912 = vpop.permute.xlu0 %911
    %914 = vrot.lane.b32.xlu0 %v906, 12
    %v915 = vpop.permute.xlu0 %914
    %v917 = vsel %vm75, %v906, %v909
    %v918 = vsel %vm201, %v917, %v912
    %v919 = vsel %vm203, %v918, %v915
    %v920 = vld [vmem:[%s3] sm:$0x1]
    %v922 = vlaneseq
    %v923 = vshrl.u32 %v922, 7
    %v924 = vsub.s32 0, %v923
    %v925 = vrot.slane %v920, %v924
    %v927 = vsub.f32 %v885, %v925
    %v928 = vld [vmem:[%s4] sm:$0x1]
    %v930 = vlaneseq
    %v931 = vshrl.u32 %v930, 7
    %v932 = vsub.s32 0, %v931
    %v933 = vrot.slane %v928, %v932
    %v935 = vmul.f32 %v927, %v933
    %v936 = vmul.f32 %v935, %v903
    %v937 = vadd.f32 %v936, %v919
    %vm938 = vcmask 123904
    %939 = vst.msk [vmem:[#allocation7] sm:$0x3] %vm938, %v937
    // Predicated region
    $region62: #{tpu_custom_call.1} parent=1 // pred_check
      _
    $region63: #{tpu_custom_call.1} parent=1 // pred_check_branch
      %941 = sbr.rel (0) target = $region65
    $region64: #{tpu_custom_call.1} parent=1 // pred_region
      %s943 = ssub.s32 32, 32
      %944 = vsyncadd [#allocation4], %s943
      %s946 = sshll.u32 [#allocation7], 4
      %s947 = int_to_ptr.vmem [resolvable:$true] %s946
      %949 = dma.vmem_to_hbm [thread:$0]  %s947, 32, %s13, [#allocation4]
    $region65: #{tpu_custom_call.1} parent=1 // pred_fallthru
      _
    // Predicated region
    $region66: #{tpu_custom_call.1} parent=1 // pred_check
      _
    $region67: #{tpu_custom_call.1} parent=1 // pred_check_branch
      %951 = sbr.rel (0) target = $region69
    $region68: #{tpu_custom_call.1} parent=1 // pred_region
      %952 = dma.done [#allocation4], 32
    $region69: #{tpu_custom_call.1} parent=1 // pred_fallthru
      _
    %953 = vsyncpa [#allocation3], 1
    %954 = vsyncpa [#allocation6], 1
    %955 = vsyncpa [#allocation4], 1

</llo_original>
